<compile_context>
chip_gen: v7x
topology: tpu7x:2x2x1
jax: 0.10.0
libtpu: 0.0.40
codegen_flags: <defaults>
</compile_context>

<pallas_src>
import functools

import jax
import jax.numpy as jnp
from jax.experimental import pallas as pl
from jax.experimental.pallas import tpu as pltpu


def _round_up(a, b):
    return ((a + b - 1) // b) * b


def _layernorm_kernel(x_ref, gamma_ref, beta_ref, o_ref, *, eps, hidden,
                      hidden_padded):
    # One tile of rows: (tr, Hp). Compute in f32 for stability.
    x = x_ref[...].astype(jnp.float32)
    h = jnp.float32(hidden)

    # Two-pass variance: mean first, then centered sum of squares. Matches the
    # reference numerics (no E[x^2]-E[x]^2 cancellation); extra XLU reduce is
    # free under the HBM-bound roofline.
    mu = jnp.sum(x, axis=-1, keepdims=True) / h
    d = x - mu
    if hidden_padded != hidden:
        # x is zero-padded beyond `hidden`, so the mean is already correct;
        # only the (0 - mu)^2 contribution to the variance needs masking.
        lane = jax.lax.broadcasted_iota(jnp.int32, x.shape, x.ndim - 1)
        d = jnp.where(lane < hidden, d, 0.0)
    # torch.std default is unbiased (ddof=1), matching the reference module.
    var = jnp.sum(d * d, axis=-1, keepdims=True) / jnp.float32(hidden - 1)
    sigma = jnp.sqrt(var)

    # Per-row reciprocal instead of a (tr, Hp) element-wise divide.
    # approx=False keeps exact numerics (review: compute is hidden anyway).
    inv = pl.reciprocal(sigma + jnp.float32(eps), approx=False)

    gamma = gamma_ref[...]  # (1, Hp) f32, resident across the grid
    beta = beta_ref[...]
    # Padded lanes: d == 0, gamma == 0, beta == 0  ->  output 0 (sliced away).
    o_ref[...] = (d * (inv * gamma) + beta).astype(o_ref.dtype)


def _vmem_capacity_bytes():
    """Physical VMEM per TensorCore (generation-aware), with a safe fallback."""
    try:
        cap = int(pltpu.get_tpu_info().vmem_capacity_bytes)
        if cap > 0:
            return cap
    except Exception:
        pass
    return 64 * 1024 * 1024  # conservative (v7x-sized) fallback


def _choose_tiling(R, Hp, dtype):
    """Pick (row_tile, vmem_limit_bytes).

    * tile budget = ~65% of physical VMEM (~40 MiB v7x, ~83 MiB v5e/v6e),
    * per-input-block BYTE cap (~8 MiB) instead of a fixed row cap,
    * >= ~4 grid steps so both v7x TensorCores get work and the pipeline
      actually overlaps,
    * vmem limit from real double-buffered block bytes + temps + margin.
    """
    itemsize = jnp.dtype(dtype).itemsize
    # Sub-32-bit dtypes pack along sublanes: keep row tiles full-width.
    sub = {4: 8, 2: 16, 1: 32}.get(itemsize, 8)

    vmem_cap = _vmem_capacity_bytes()
    budget = (vmem_cap * 13) // 20  # ~65% of physical VMEM

    # Per-row VMEM cost: double-buffered input + output blocks plus ~4 live
    # (tr, Hp) f32 temporaries inside the kernel body.
    per_row = 2 * 2 * Hp * itemsize + 4 * Hp * 4
    tr = budget // per_row

    # Byte cap on a single input block: multi-MiB contiguous DMAs already run
    # at ~85%+ of HBM roofline; larger blocks only add VMEM pressure. Small Hp
    # no longer collapses the block (rows grow instead).
    block_cap = 8 * 1024 * 1024
    tr = min(tr, max(block_cap // (Hp * itemsize), sub))

    # Keep the grid at >= ~4 steps (2 per TensorCore on v7x) when R allows it.
    min_steps = 4
    tr = min(tr, _round_up((R + min_steps - 1) // min_steps, sub))

    tr = max((tr // sub) * sub, sub)
    tr = min(tr, _round_up(R, sub))

    limit = (2 * tr * Hp * itemsize * 2      # double-buffered input + output
             + 2 * 2 * Hp * 4                # gamma / beta (f32, 2 buffers)
             + 4 * tr * Hp * 4               # live f32 temporaries
             + 8 * 1024 * 1024)              # margin for Mosaic internal scratch
    limit = max(min(limit, vmem_cap - 2 * 1024 * 1024), 16 * 1024 * 1024)
    return int(tr), int(limit)


def layer_norm(z, sigma_param, mu_param, eps=1e-8, *, row_tile=None,
               vmem_limit_bytes=None):
    """Pallas equivalent of the PyTorch LayerNorm.forward.

    z: (..., H) array; sigma_param (scale) and mu_param (shift): (H,) arrays.
    """
    # Replicate the PyTorch quirk `if z.size(1) == 1: return z`: it checks
    # axis 1, NOT the normalized last axis — a (B, 1, H) input skips
    # normalization on purpose (matching the reference module).
    if z.ndim >= 2 and z.shape[1] == 1:
        return z

    H = z.shape[-1]
    orig_shape = z.shape
    x2d = z.reshape(-1, H)
    R = x2d.shape[0]

    # Lane-dense hidden dim: pad H up to a multiple of 128 so every vreg is
    # fully occupied and output stores are unmasked. No-op when H % 128 == 0.
    Hp = _round_up(H, 128)
    pad = Hp - H

    # Cast params to f32 once here instead of per grid step inside the kernel.
    gamma2d = sigma_param.reshape(1, H).astype(jnp.float32)
    beta2d = mu_param.reshape(1, H).astype(jnp.float32)
    if pad:
        x2d = jnp.pad(x2d, ((0, 0), (0, pad)))
        gamma2d = jnp.pad(gamma2d, ((0, 0), (0, pad)))
        beta2d = jnp.pad(beta2d, ((0, 0), (0, pad)))

    tr, vlimit = _choose_tiling(R, Hp, x2d.dtype)
    if row_tile is not None:
        tr = row_tile
    if vmem_limit_bytes is not None:
        vlimit = vmem_limit_bytes

    kernel = functools.partial(_layernorm_kernel, eps=eps, hidden=H,
                               hidden_padded=Hp)

    # Ragged last ROW block: grid = cdiv(R, tr); tail out-of-bounds writes are
    # dropped by Pallas, so no row-dim pad / slice HBM round trips.
    out2d = pl.pallas_call(
        kernel,
        out_shape=jax.ShapeDtypeStruct((R, Hp), z.dtype),
        grid_spec=pltpu.PrefetchScalarGridSpec(
            num_scalar_prefetch=0,
            grid=(pl.cdiv(R, tr),),
            in_specs=[
                pl.BlockSpec((tr, Hp), lambda i: (i, 0)),
                pl.BlockSpec((1, Hp), lambda i: (0, 0)),
                pl.BlockSpec((1, Hp), lambda i: (0, 0)),
            ],
            out_specs=pl.BlockSpec((tr, Hp), lambda i: (i, 0)),
        ),
        compiler_params=pltpu.CompilerParams(
            dimension_semantics=("parallel",),
            vmem_limit_bytes=vlimit,
        ),
    )(x2d, gamma2d, beta2d)

    if pad:
        out2d = out2d[:, :H]
    return out2d.reshape(orig_shape)


def _reference(x, sigma_param, mu_param, eps):
    H = x.shape[-1]
    mu = jnp.mean(x, axis=-1, keepdims=True)
    std = jnp.sqrt(jnp.sum((x - mu) ** 2, axis=-1, keepdims=True) / (H - 1))
    return (x - mu) / (std + eps) * sigma_param + mu_param


if __name__ == "__main__":
    key = jax.random.PRNGKey(0)
    batch, seq, hidden = 2, 8, 32

    x = jax.random.normal(key, (batch, seq, hidden), dtype=jnp.float32)

    # Deterministic parameter init matching nn.Parameter(t.ones(size)) / t.zeros(size).
    sigma_param = jnp.ones((hidden,), dtype=jnp.float32)
    mu_param = jnp.zeros((hidden,), dtype=jnp.float32)

    out = jax.block_until_ready(layer_norm(x, sigma_param, mu_param, eps=1e-8))
    ref = _reference(x, sigma_param, mu_param, 1e-8)
    assert jnp.allclose(out, ref, atol=1e-5, rtol=1e-5)

    # Ragged row count (R=15) + H<128 lane-padding path.
    x2 = jax.random.normal(jax.random.PRNGKey(1), (3, 5, hidden), dtype=jnp.float32)
    out2 = jax.block_until_ready(layer_norm(x2, sigma_param, mu_param, eps=1e-8))
    ref2 = _reference(x2, sigma_param, mu_param, 1e-8)
    assert jnp.allclose(out2, ref2, atol=1e-5, rtol=1e-5)

    # Lane-dense no-pad path: H already a multiple of 128, non-trivial params.
    h3 = 256
    ka, kb, kc = jax.random.split(jax.random.PRNGKey(2), 3)
    x3 = jax.random.normal(ka, (2, 16, h3), dtype=jnp.float32)
    g3 = jax.random.normal(kb, (h3,), dtype=jnp.float32)
    b3 = jax.random.normal(kc, (h3,), dtype=jnp.float32)
    out3 = jax.block_until_ready(layer_norm(x3, g3, b3, eps=1e-8))
    ref3 = _reference(x3, g3, b3, 1e-8)
    assert jnp.allclose(out3, ref3, atol=1e-5, rtol=1e-5)

    print("KERNEL_OK")
</pallas_src>

<mosaic_0001>
module attributes {stable_mosaic.version = 11 : i64} {
  func.func @_layernorm_kernel(%arg0: i32, %arg1: memref<8x128xf32, #tpu.memory_space<vmem>>, %arg2: memref<1x128xf32, #tpu.memory_space<vmem>>, %arg3: memref<1x128xf32, #tpu.memory_space<vmem>>, %arg4: memref<8x128xf32, #tpu.memory_space<vmem>>) attributes {dimension_semantics = [#tpu.dimension_semantics<parallel>], iteration_bounds = array<i64: 2>, scalar_prefetch = 0 : i64, scratch_operands = 0 : i64, tpu.core_type = #tpu.core_type<tc>, window_params = [{transform_indices = @transform_0, window_bounds = array<i64: 8, 128>}, {pipeline_mode = #tpu.pipeline_mode<synchronous>, transform_indices = @transform_1, window_bounds = array<i64: 1, 128>}, {pipeline_mode = #tpu.pipeline_mode<synchronous>, transform_indices = @transform_2, window_bounds = array<i64: 1, 128>}, {transform_indices = @transform_3, window_bounds = array<i64: 8, 128>}]} {
    %c0 = arith.constant 0 : index
    %c0_0 = arith.constant 0 : index
    %0 = vector.load %arg1[%c0, %c0_0] : memref<8x128xf32, #tpu.memory_space<vmem>>, vector<8x128xf32>
    %cst = arith.constant dense<0.000000e+00> : vector<8xf32>
    %1 = vector.multi_reduction <add>, %0, %cst [1] : vector<8x128xf32> to vector<8xf32>
    %2 = vector.shape_cast %1 : vector<8xf32> to vector<8x1xf32>
    %cst_1 = arith.constant 3.200000e+01 : f32
    %3 = vector.broadcast %cst_1 : f32 to vector<8x1xf32>
    %4 = arith.divf %2, %3 : vector<8x1xf32>
    %5 = vector.broadcast %4 : vector<8x1xf32> to vector<8x128xf32>
    %6 = arith.subf %0, %5 : vector<8x128xf32>
    %7 = tpu.iota {dimensions = array<i32: 1>} : vector<8x128xi32>
    %c32_i32 = arith.constant 32 : i32
    %8 = vector.broadcast %c32_i32 : i32 to vector<8x128xi32>
    %9 = arith.cmpi slt, %7, %8 : vector<8x128xi32>
    %cst_2 = arith.constant 0.000000e+00 : f32
    %10 = vector.broadcast %cst_2 : f32 to vector<8x128xf32>
    %11 = arith.select %9, %6, %10 : vector<8x128xi1>, vector<8x128xf32>
    %12 = arith.mulf %11, %11 : vector<8x128xf32>
    %cst_3 = arith.constant dense<0.000000e+00> : vector<8xf32>
    %13 = vector.multi_reduction <add>, %12, %cst_3 [1] : vector<8x128xf32> to vector<8xf32>
    %14 = vector.shape_cast %13 : vector<8xf32> to vector<8x1xf32>
    %cst_4 = arith.constant 3.100000e+01 : f32
    %15 = vector.broadcast %cst_4 : f32 to vector<8x1xf32>
    %16 = arith.divf %14, %15 : vector<8x1xf32>
    %17 = math.sqrt %16 : vector<8x1xf32>
    %cst_5 = arith.constant 9.99999993E-9 : f32
    %18 = vector.broadcast %cst_5 : f32 to vector<8x1xf32>
    %19 = arith.addf %17, %18 : vector<8x1xf32>
    %20 = tpu.reciprocal %19 : vector<8x1xf32> -> vector<8x1xf32>
    %c0_6 = arith.constant 0 : index
    %c0_7 = arith.constant 0 : index
    %21 = vector.load %arg2[%c0_6, %c0_7] : memref<1x128xf32, #tpu.memory_space<vmem>>, vector<1x128xf32>
    %c0_8 = arith.constant 0 : index
    %c0_9 = arith.constant 0 : index
    %22 = vector.load %arg3[%c0_8, %c0_9] : memref<1x128xf32, #tpu.memory_space<vmem>>, vector<1x128xf32>
    %23 = vector.broadcast %20 : vector<8x1xf32> to vector<8x128xf32>
    %24 = vector.broadcast %21 : vector<1x128xf32> to vector<8x128xf32>
    %25 = arith.mulf %23, %24 : vector<8x128xf32>
    %26 = arith.mulf %11, %25 : vector<8x128xf32>
    %27 = vector.broadcast %22 : vector<1x128xf32> to vector<8x128xf32>
    %28 = arith.addf %26, %27 : vector<8x128xf32>
    %c0_10 = arith.constant 0 : index
    %c0_11 = arith.constant 0 : index
    %29 = vector.load %arg4[%c0_10, %c0_11] : memref<8x128xf32, #tpu.memory_space<vmem>>, vector<8x128xf32>
    tpu.vector_store %arg4[%c0_10, %c0_11], %28 {strides = array<i32>} : memref<8x128xf32, #tpu.memory_space<vmem>>, vector<8x128xf32>,
    return
  }
  func.func @transform_0(%arg0: i32) -> (i32, i32) {
    %c0_i32 = arith.constant 0 : i32
    %c0_i32_0 = arith.constant 0 : i32
    return %arg0, %c0_i32 : i32, i32
  }
  func.func @transform_1(%arg0: i32) -> (i32, i32) {
    %c0_i32 = arith.constant 0 : i32
    %c0_i32_0 = arith.constant 0 : i32
    %c0_i32_1 = arith.constant 0 : i32
    return %c0_i32, %c0_i32_0 : i32, i32
  }
  func.func @transform_2(%arg0: i32) -> (i32, i32) {
    %c0_i32 = arith.constant 0 : i32
    %c0_i32_0 = arith.constant 0 : i32
    %c0_i32_1 = arith.constant 0 : i32
    return %c0_i32, %c0_i32_0 : i32, i32
  }
  func.func @transform_3(%arg0: i32) -> (i32, i32) {
    %c0_i32 = arith.constant 0 : i32
    %c0_i32_0 = arith.constant 0 : i32
    return %arg0, %c0_i32 : i32, i32
  }
}

</mosaic_0001>

<llo_original>
// kernel: tpu_custom_call.1
$region0: #{tpu_custom_call.1}
  #allocation0 [shape = 'u32[]', space=smem, size = 0x4, offset = 0x4, fixed_abs, tag = 'smem constant byte address 0x4 - core index']
  #allocation1 [shape = 'u32[144,128]{1,0:T(1,128)}', space=vmem, size = 0x12000, scoped, tag = 'internal scratch']
  %s0 = inlined_call_operand.hbm [shape: f32[16,128], index: 0, kind: input, shape index: {}]
  %s1 = inlined_call_operand.vmem [shape: f32[1,128], index: 1, kind: input, shape index: {}]
  %s2 = inlined_call_operand.vmem [shape: f32[1,128], index: 2, kind: input, shape index: {}]
  %s3 = inlined_call_operand.hbm [shape: f32[16,128], index: 3, kind: output, shape index: {}]
  %s4 = sld [smem:[#allocation0]]
  $region49: #{tpu_custom_call.1} parent=0
    _
  %s6 = ssub.s32 1, %s4
  %s7 = scalar_select 0, %s6, %s4
  $region1: #{tpu_custom_call.1} parent=0
    #allocation2 [shape = 'u8[8192]{0}', space=vmem, size = 0x2000, scoped, tag = 'input window, operand 0']
    #allocation3 [shape = 's32[2]{0}', space=sflag, size = 0x8, scoped, tag = 'scoped memory for tpu_custom_call.1']
    #allocation4 [shape = 's32[2]{0}', space=sflag, size = 0x8, scoped, tag = 'scoped memory for tpu_custom_call.1']
    #allocation5 [shape = 'u8[8192]{0}', space=vmem, size = 0x2000, scoped, tag = 'output window, operand 0']
    %8 = vsyncpa [#allocation3], 0
    %s9 = scalar_lea.sflag [#allocation3], 1
    %10 = vsyncpa %s9, 0
    %11 = vsyncpa [#allocation4], 0
    %s12 = scalar_lea.sflag [#allocation4], 1
    %13 = vsyncpa %s12, 0
    loop: start=0, step=1, limit=4
    $region2: #{tpu_custom_call.1} parent=1 // loop_pre_header
      _
    $region3: #{tpu_custom_call.1} parent=1 // loop_header
      %s15 = sphi 0, %s19
      %p16 = scmp.ge.s32.totalorder %s15, 4
      %s25 = sphi 0, %s27
      %s28 = sphi 0, %s25
      %s29 = sphi 0, %s28
      %s45 = sphi 0, %s29
      %s49 = sphi 0, %s49
      %s51 = sphi 0, %s49
      %s52 = sphi 0, %s51
      %s66 = sphi 0, %s52
      %s70 = sphi 0, %s70
      %s72 = sphi 0, %s70
      %s73 = sphi 0, %s72
      %s87 = sphi 0, %s73
      %s93 = sphi 0, %s95
      %s96 = sphi 0, %s93
      %s97 = sphi 0, %s96
      %s113 = sphi 0, %s97
    $region4: #{tpu_custom_call.1} parent=1 // loop_header_branch
      %18 = sbr.rel (%p16) target = $region8
    $region5: #{tpu_custom_call.1} parent=1 // loop_body
      %s20 = ssub.s32 %s15, 1
      %s21 = ssub.s32 %s15, 2
      %s22 = sadd.s32 %s15, 1
      %s23 = ssub.s32 %s15, %s22
      %p24 = scmp.eq.s32.totalorder %s23, 0
      %s26 = sadd.s32 %s25, 1
      %s27 = scalar_select %p24, %s25, %s26
      %p30 = pneg %p24
      %p31 = scmp.eq.s32.totalorder %s15, 1
      %p32 = por %p30, %p31
      %p33 = scmp.ne.s32.totalorder %s25, %s28
      %p34 = scmp.eq.s32.totalorder %s15, 0
      %p35 = por %p33, %p34
      %p36 = scmp.ne.s32.totalorder %s25, %s28
      %p37 = scmp.eq.s32.totalorder %s20, 1
      %p38 = por %p36, %p37
      %p39 = scmp.ne.s32.totalorder %s28, %s29
      %p40 = scmp.eq.s32.totalorder %s20, 0
      %p41 = por %p39, %p40
      %p42 = scmp.ne.s32.totalorder %s28, %s29
      %p43 = scmp.eq.s32.totalorder %s21, 1
      %p44 = por %p42, %p43
      %p46 = scmp.ne.s32.totalorder %s29, %s45
      %p47 = scmp.eq.s32.totalorder %s21, 0
      %p48 = por %p46, %p47
      %s50 = sadd.s32 %s49, 1
      %p53 = scmp.eq.s32.totalorder %s15, 1
      %p54 = scmp.ne.s32.totalorder %s49, %s51
      %p55 = scmp.eq.s32.totalorder %s15, 0
      %p56 = por %p54, %p55
      %p57 = scmp.ne.s32.totalorder %s49, %s51
      %p58 = scmp.eq.s32.totalorder %s20, 1
      %p59 = por %p57, %p58
      %p60 = scmp.ne.s32.totalorder %s51, %s52
      %p61 = scmp.eq.s32.totalorder %s20, 0
      %p62 = por %p60, %p61
      %p63 = scmp.ne.s32.totalorder %s51, %s52
      %p64 = scmp.eq.s32.totalorder %s21, 1
      %p65 = por %p63, %p64
      %p67 = scmp.ne.s32.totalorder %s52, %s66
      %p68 = scmp.eq.s32.totalorder %s21, 0
      %p69 = por %p67, %p68
      %s71 = sadd.s32 %s70, 1
      %p74 = scmp.eq.s32.totalorder %s15, 1
      %p75 = scmp.ne.s32.totalorder %s70, %s72
      %p76 = scmp.eq.s32.totalorder %s15, 0
      %p77 = por %p75, %p76
      %p78 = scmp.ne.s32.totalorder %s70, %s72
      %p79 = scmp.eq.s32.totalorder %s20, 1
      %p80 = por %p78, %p79
      %p81 = scmp.ne.s32.totalorder %s72, %s73
      %p82 = scmp.eq.s32.totalorder %s20, 0
      %p83 = por %p81, %p82
      %p84 = scmp.ne.s32.totalorder %s72, %s73
      %p85 = scmp.eq.s32.totalorder %s21, 1
      %p86 = por %p84, %p85
      %p88 = scmp.ne.s32.totalorder %s73, %s87
      %p89 = scmp.eq.s32.totalorder %s21, 0
      %p90 = por %p88, %p89
      %s91 = ssub.s32 %s15, %s22
      %p92 = scmp.eq.s32.totalorder %s91, 0
      %s94 = sadd.s32 %s93, 1
      %s95 = scalar_select %p92, %s93, %s94
      %p98 = pneg %p92
      %p99 = scmp.eq.s32.totalorder %s15, 1
      %p100 = por %p98, %p99
      %p101 = scmp.ne.s32.totalorder %s93, %s96
      %p102 = scmp.eq.s32.totalorder %s15, 0
      %p103 = por %p101, %p102
      %p104 = scmp.ne.s32.totalorder %s93, %s96
      %p105 = scmp.eq.s32.totalorder %s20, 1
      %p106 = por %p104, %p105
      %p107 = scmp.ne.s32.totalorder %s96, %s97
      %p108 = scmp.eq.s32.totalorder %s20, 0
      %p109 = por %p107, %p108
      %p110 = scmp.ne.s32.totalorder %s96, %s97
      %p111 = scmp.eq.s32.totalorder %s21, 1
      %p112 = por %p110, %p111
      %p114 = scmp.ne.s32.totalorder %s97, %s113
      %p115 = scmp.eq.s32.totalorder %s21, 0
      %p116 = por %p114, %p115
      %p117 = scmp.le.s32.totalorder 1, %s15
      %p118 = scmp.lt.s32.totalorder %s15, 3
      %p119 = pnand %p117, %p118
      %p120 = pneg %p119
      // Predicated region
      $region9: #{tpu_custom_call.1} parent=5 // pred_check
        _
      $region10: #{tpu_custom_call.1} parent=5 // pred_check_branch
        %122 = sbr.rel (%p119) target = $region12
      $region11: #{tpu_custom_call.1} parent=5 // pred_region
        %s123 = ssub.s32 %s15, 1
        // Predicated region
        $region13: #{tpu_custom_call.1} parent=11 // pred_check
          %p124 = pneg %p62
        $region14: #{tpu_custom_call.1} parent=11 // pred_check_branch
          %126 = sbr.rel (%p124) target = $region16
        $region15: #{tpu_custom_call.1} parent=11 // pred_region
          _
        $region16: #{tpu_custom_call.1} parent=11 // pred_fallthru
          _
        // Predicated region
        $region17: #{tpu_custom_call.1} parent=11 // pred_check
          %p127 = pneg %p83
        $region18: #{tpu_custom_call.1} parent=11 // pred_check_branch
          %129 = sbr.rel (%p127) target = $region20
        $region19: #{tpu_custom_call.1} parent=11 // pred_region
          _
        $region20: #{tpu_custom_call.1} parent=11 // pred_fallthru
          _
      $region12: #{tpu_custom_call.1} parent=5 // pred_fallthru
        _
      %p130 = scmp.lt.s32.totalorder %s15, 2
      // Predicated region
      $region21: #{tpu_custom_call.1} parent=5 // pred_check
        %p131 = pneg %p130
      $region22: #{tpu_custom_call.1} parent=5 // pred_check_branch
        %133 = sbr.rel (%p131) target = $region24
      $region23: #{tpu_custom_call.1} parent=5 // pred_region
        // Predicated region
        $region25: #{tpu_custom_call.1} parent=23 // pred_check
          %p134 = pneg %p35
        $region26: #{tpu_custom_call.1} parent=23 // pred_check_branch
          %136 = sbr.rel (%p134) target = $region28
        $region27: #{tpu_custom_call.1} parent=23 // pred_region
          %s137 = sand.u32 %s25, 1
          %s138 = scalar_lea.sflag [#allocation3], %s137
          %s139 = sand.u32 %s25, 1
          %s140 = smul.addr %s139, 8
          %s141 = scalar_lea.vmem [#allocation2], %s140
          %s143 = ssub.s32 128, 128
          %144 = vsyncadd %s138, %s143
          %s145 = smul.addr %s15, 128
          %s146 = scalar_lea.hbm %s0, %s145
          %s148 = sshll.u32 %s141, 4
          %s149 = int_to_ptr.vmem [resolvable:$true] %s148
          %151 = dma.hbm_to_vmem [thread:$0]  %s146, 128, %s149, %s138
        $region28: #{tpu_custom_call.1} parent=23 // pred_fallthru
          _
      $region24: #{tpu_custom_call.1} parent=5 // pred_fallthru
        _
      %p152 = scmp.le.s32.totalorder 1, %s15
      %p153 = scmp.lt.s32.totalorder %s15, 3
      %p154 = pnand %p152, %p153
      %p155 = pneg %p154
      // Predicated region
      $region29: #{tpu_custom_call.1} parent=5 // pred_check
        _
      $region30: #{tpu_custom_call.1} parent=5 // pred_check_branch
        %157 = sbr.rel (%p154) target = $region32
      $region31: #{tpu_custom_call.1} parent=5 // pred_region
        %s158 = ssub.s32 %s15, 1
        %s159 = sand.u32 %s28, 1
        %s160 = scalar_lea.sflag [#allocation3], %s159
        %s161 = sand.u32 %s28, 1
        %s162 = smul.addr %s161, 8
        %s163 = scalar_lea.vmem [#allocation2], %s162
        // Predicated region
        $region33: #{tpu_custom_call.1} parent=31 // pred_check
          %p164 = pneg %p41
        $region34: #{tpu_custom_call.1} parent=31 // pred_check_branch
          %166 = sbr.rel (%p164) target = $region36
        $region35: #{tpu_custom_call.1} parent=31 // pred_region
          %167 = dma.done %s160, 128
        $region36: #{tpu_custom_call.1} parent=31 // pred_fallthru
          _
        %s168 = sand.u32 %s28, 1
        %s169 = scalar_lea.sflag [#allocation3], %s168
        %s170 = sand.u32 %s28, 1
        %s171 = smul.addr %s170, 8
        %s172 = scalar_lea.vmem [#allocation2], %s171
        %p173 = pneg %p41
        %p174 = pneg %p38
        %p175 = pneg %p62
        %p176 = pneg %p59
        %p177 = pneg %p83
        %p178 = pneg %p80
        %p179 = pneg %p109
        %p180 = pneg %p106
        %s181 = sand.u32 %s96, 1
        %s182 = scalar_lea.sflag [#allocation4], %s181
        %s183 = sand.u32 %s96, 1
        %s184 = smul.addr %s183, 8
        %s185 = scalar_lea.vmem [#allocation5], %s184
        %v186 = vld [vmem:[%s163] sm:$0xff]
        %187 = vadd.xlane.f32.xlu0 %v186
        %v188 = vpop.xlane.xlu0 %187
        %v189 = vrcp.pop 32.0
        %v190 = vmul.f32 %v188, %v189
        %v191 = vsub.f32 %v186, %v190
        %v192 = vlaneseq
        %v193 = vand.u32 %v192, 127
        %vm194 = vcmp.lt.s32.totalorder %v193, 32
        %v195 = vsel %vm194, %v191, 0.0
        %v196 = vmul.f32 %v195, %v195
        %197 = vadd.xlane.f32.xlu0 %v196
        %v198 = vpop.xlane.xlu0 %197
        %v199 = vrcp.pop 31.0
        %v200 = vmul.f32 %v198, %v199
        %v201 = vrsqrt.pop %v200
        %v202 = vmul.f32 %v200, %v201
        %vm203 = vcmp.eq.f32.partialorder %v200, inf
        %v204 = vsel %vm203, %v200, %v202
        %vm205 = vcmp.eq.f32.partialorder %v200, 0.0
        %v206 = vand.u32 %v200, 2147483648
        %v207 = vsel %vm205, %v206, %v204
        %v208 = vadd.f32 %v207, 1e-08
        %v209 = vrcp.pop %v208
        %v210 = vld [vmem:[%s1] sm:$0x1]
        %v211 = vld [vmem:[%s2] sm:$0x1]
        %v213 = vlaneseq
        %v214 = vshrl.u32 %v213, 7
        %v215 = vsub.s32 0, %v214
        %v216 = vrot.slane %v210, %v215
        %v218 = vmul.f32 %v209, %v216
        %v219 = vmul.f32 %v195, %v218
        %v221 = vlaneseq
        %v222 = vshrl.u32 %v221, 7
        %v223 = vsub.s32 0, %v222
        %v224 = vrot.slane %v211, %v223
        %v226 = vadd.f32 %v219, %v224
        %227 = vst [vmem:[%s185] sm:$0xff] %v226
        %s228 = sand.u32 %s96, 1
        %s229 = scalar_lea.sflag [#allocation4], %s228
        %s230 = sand.u32 %s96, 1
        %s231 = smul.addr %s230, 8
        %s232 = scalar_lea.vmem [#allocation5], %s231
        // Predicated region
        $region37: #{tpu_custom_call.1} parent=31 // pred_check
          %p233 = pneg %p106
        $region38: #{tpu_custom_call.1} parent=31 // pred_check_branch
          %235 = sbr.rel (%p233) target = $region40
        $region39: #{tpu_custom_call.1} parent=31 // pred_region
          %s237 = ssub.s32 128, 128
          %238 = vsyncadd %s229, %s237
          %s239 = smul.addr %s20, 128
          %s240 = scalar_lea.hbm %s3, %s239
          %s242 = sshll.u32 %s232, 4
          %s243 = int_to_ptr.vmem [resolvable:$true] %s242
          %245 = dma.vmem_to_hbm [thread:$0]  %s243, 128, %s240, %s229
        $region40: #{tpu_custom_call.1} parent=31 // pred_fallthru
          _
      $region32: #{tpu_custom_call.1} parent=5 // pred_fallthru
        _
      %p246 = scmp.le.s32.totalorder 2, %s15
      // Predicated region
      $region41: #{tpu_custom_call.1} parent=5 // pred_check
        %p247 = pneg %p246
      $region42: #{tpu_custom_call.1} parent=5 // pred_check_branch
        %249 = sbr.rel (%p247) target = $region44
      $region43: #{tpu_custom_call.1} parent=5 // pred_region
        %s250 = ssub.s32 %s15, 2
        // Predicated region
        $region45: #{tpu_custom_call.1} parent=43 // pred_check
          %p251 = pneg %p112
        $region46: #{tpu_custom_call.1} parent=43 // pred_check_branch
          %253 = sbr.rel (%p251) target = $region48
        $region47: #{tpu_custom_call.1} parent=43 // pred_region
          %s254 = sand.u32 %s97, 1
          %s255 = scalar_lea.sflag [#allocation4], %s254
          %s256 = sand.u32 %s97, 1
          %s257 = smul.addr %s256, 8
          %s258 = scalar_lea.vmem [#allocation5], %s257
          %259 = dma.done %s255, 128
        $region48: #{tpu_custom_call.1} parent=43 // pred_fallthru
          _
      $region44: #{tpu_custom_call.1} parent=5 // pred_fallthru
        _
    $region6: #{tpu_custom_call.1} parent=1 // loop_footer
      %s19 = sadd.s32 1, %s15
    $region7: #{tpu_custom_call.1} parent=1 // loop_footer_branch
      %14 = sbr.rel target = $region3
    $region8: #{tpu_custom_call.1} parent=1 // loop_exit
      _
    %260 = vsyncpa [#allocation3], 1
    %s261 = scalar_lea.sflag [#allocation3], 1
    %262 = vsyncpa %s261, 1
    %263 = vsyncpa [#allocation4], 1
    %s264 = scalar_lea.sflag [#allocation4], 1
    %265 = vsyncpa %s264, 1

</llo_original>
